<compile_context>
chip_gen: v7x
topology: tpu7x:2x2x1
jax: 0.10.0
libtpu: 0.0.40
codegen_flags: <defaults>
</compile_context>

<pallas_src>
import functools

import jax
import jax.numpy as jnp
from jax.experimental import pallas as pl
from jax.experimental.pallas import tpu as pltpu

LANE = 128
SUB = 8


def _round_up(v, m):
    return ((v + m - 1) // m) * m


def _cnn_kernel(x_ref, w_ref, b_ref, o_ref, conv_ref, *,
                block_rows, lp, l_out, k_size, r_rows):
    # x_ref:    (block_rows * lp, Ci_p)  bf16 input tile (batch-major rows, channels in lanes)
    # w_ref:    (K, Ci_p, Co_p)          bf16 resident weights (tap-major)
    # b_ref:    (1, Co_p)                f32 resident bias
    # o_ref:    (block_rows, Co_p)       f32 pooled output tile
    # conv_ref: (block_rows * lp, Co_p)  f32 scratch holding per-position conv values
    co_p = w_ref.shape[2]

    # K-tap accumulation: conv row r (= n*lp + l) gets sum_k x[n, l+k, :] @ w_k.
    # Only the first r_rows rows are computed so every tap slice stays in-bounds; the
    # skipped tail rows correspond to l >= l_out positions of the last batch row only.
    acc = jnp.dot(x_ref[pl.ds(0, r_rows), :], w_ref[0],
                  preferred_element_type=jnp.float32)
    for k in range(1, k_size):                       # static unroll, K is small
        acc = acc + jnp.dot(x_ref[pl.ds(k, r_rows), :], w_ref[k],
                            preferred_element_type=jnp.float32)

    conv_ref[pl.ds(0, r_rows), :] = acc
    tail = block_rows * lp - r_rows
    conv_ref[pl.ds(r_rows, tail), :] = jnp.zeros((tail, co_p), jnp.float32)

    # Vectorized max over the real L_out positions of every batch row, then bias + ReLU
    # (hoisted past the max; exact since relu(x + b) is monotone in x), one dense store.
    conv = conv_ref[...].reshape(block_rows, lp, co_p)
    pooled = jnp.max(conv[:, :l_out, :], axis=1)                 # (block_rows, Co_p)
    o_ref[...] = jnp.maximum(pooled + b_ref[...], 0.0).astype(o_ref.dtype)


def cnn_forward(x, weight, bias, *, kernel_size, padding=0, dilation=1, m_target=4096):
    """Conv1d(valid) -> ReLU -> max over length.

    x: (N, C_in, L) f32; weight: (C_out, C_in, K); bias: (C_out,). Returns (N, C_out) f32.
    """
    assert padding == 0 and dilation == 1          # defaults of the reference module
    N, C_in, L = x.shape
    C_out, w_cin, K = weight.shape
    assert w_cin == C_in and K == kernel_size
    L_out = L - (K - 1)
    assert L_out >= 1

    pad8 = _round_up(max(K - 1, 1), SUB)           # tap overhang handled by skipping tail rows
    Lp = _round_up(max(L, L_out + pad8), SUB)      # per-row segment, sublane aligned
    Ci_p = _round_up(C_in, SUB)
    Co_p = _round_up(C_out, LANE)                  # lane-dense output channels

    # ---- batch tile size: big MXU M-dim, but VMEM-safe on v7x and >= 2 grid steps ----
    N8 = _round_up(N, SUB)
    tn = max(SUB, (m_target // Lp) // SUB * SUB)
    if N8 >= 2 * SUB:
        tn = min(tn, max(SUB, (N8 // 2) // SUB * SUB))   # keep the grid feeding both v7x TCs
    else:
        tn = min(tn, N8)

    def _vmem_est(t):
        m = t * Lp
        lane_ci = max(Ci_p, LANE)                  # VMEM lane padding of the input tile
        return (2 * m * lane_ci * 2                # double-buffered bf16 input tiles (+ taps)
                + 3 * m * Co_p * 4                 # f32 conv scratch + accumulator temporaries
                + 2 * t * Co_p * 4                 # double-buffered output tiles
                + K * lane_ci * Co_p * 2 + Co_p * 4)   # resident weights + bias

    while tn > SUB and _vmem_est(tn) > 18 * 2**20:     # stay well under v7x's 64 MiB VMEM
        tn -= SUB

    N_pad = _round_up(N, tn)
    M = tn * Lp                                    # matmul M-dim per grid step
    R = M - pad8                                   # conv rows actually computed per step

    # ---- wrapper layout: (N, C_in, L) -> (N_pad*Lp, Ci_p) bf16, channels last (lane dim) ----
    x_t = jnp.transpose(x, (0, 2, 1)).astype(jnp.bfloat16)            # (N, L, C_in)
    x_t = jnp.pad(x_t, ((0, N_pad - N), (0, Lp - L), (0, Ci_p - C_in)))
    x2 = x_t.reshape(N_pad * Lp, Ci_p)

    w3 = jnp.transpose(weight, (2, 1, 0)).astype(jnp.bfloat16)        # (K, C_in, C_out)
    w3 = jnp.pad(w3, ((0, 0), (0, Ci_p - C_in), (0, Co_p - C_out)))
    b2 = jnp.pad(bias.astype(jnp.float32).reshape(1, C_out),
                 ((0, 0), (0, Co_p - C_out)))

    kernel = functools.partial(_cnn_kernel, block_rows=tn, lp=Lp,
                               l_out=L_out, k_size=K, r_rows=R)

    cost = pl.CostEstimate(
        flops=2 * N_pad * L_out * C_in * K * C_out,
        transcendentals=0,
        bytes_accessed=int(x2.size) * 2 + int(w3.size) * 2 + int(b2.size) * 4
                       + N_pad * Co_p * 4,
    )

    out_padded = pl.pallas_call(
        kernel,
        out_shape=jax.ShapeDtypeStruct((N_pad, Co_p), jnp.float32),
        grid_spec=pltpu.PrefetchScalarGridSpec(
            num_scalar_prefetch=0,
            grid=(N_pad // tn,),
            in_specs=[
                pl.BlockSpec((M, Ci_p), lambda i: (i, 0)),            # input tile (tn rows of Lp)
                pl.BlockSpec((K, Ci_p, Co_p), lambda i: (0, 0, 0)),   # resident weights
                pl.BlockSpec((1, Co_p), lambda i: (0, 0)),            # resident bias
            ],
            out_specs=pl.BlockSpec((tn, Co_p), lambda i: (i, 0)),
            scratch_shapes=[pltpu.VMEM((M, Co_p), jnp.float32)],
        ),
        compiler_params=pltpu.CompilerParams(
            dimension_semantics=("parallel",),     # batch tiles shard across v7x's 2 TCs
            vmem_limit_bytes=32 * 1024 * 1024,
        ),
        cost_estimate=cost,
    )(x2, w3, b2)

    return out_padded[:N, :C_out]


def _reference(x, weight, bias):
    # pure-JAX reference: Conv1d -> ReLU -> max over length (PyTorch module semantics)
    out = jax.lax.conv_general_dilated(
        x, weight, window_strides=(1,), padding="VALID",
        dimension_numbers=("NCH", "OIH", "NCH"))
    out = out + bias[None, :, None]
    return jnp.max(jax.nn.relu(out), axis=2)


if __name__ == "__main__":
    # Small shapes consistent with the module's forward (Conv1d over char embeddings).
    N, C_in, L = 2, 4, 16
    C_out, K = 8, 5

    key = jax.random.PRNGKey(0)
    kx, kw, kb = jax.random.split(key, 3)
    x = jax.random.normal(kx, (N, C_in, L), dtype=jnp.float32)
    bound = 1.0 / (C_in * K) ** 0.5
    weight = jax.random.uniform(kw, (C_out, C_in, K), jnp.float32, -bound, bound)
    bias = jax.random.uniform(kb, (C_out,), jnp.float32, -bound, bound)

    out = cnn_forward(x, weight, bias, kernel_size=K)
    out = jax.block_until_ready(out)

    ref = _reference(x, weight, bias)
    assert out.shape == (N, C_out)
    # bf16 matmul inputs with f32 accumulation -> slightly loosened tolerance vs f32 reference
    assert jnp.allclose(out, ref, atol=3e-2, rtol=3e-2), (out, ref)
    print("KERNEL_OK")
</pallas_src>

<mosaic_0001>
module attributes {stable_mosaic.version = 11 : i64} {
  func.func @_cnn_kernel(%arg0: i32, %arg1: memref<192x8xbf16, #tpu.memory_space<vmem>>, %arg2: memref<5x8x128xbf16, #tpu.memory_space<vmem>>, %arg3: memref<1x128xf32, #tpu.memory_space<vmem>>, %arg4: memref<8x128xf32, #tpu.memory_space<vmem>>, %arg5: memref<192x128xf32, #tpu.memory_space<vmem>>) attributes {dimension_semantics = [#tpu.dimension_semantics<parallel>], iteration_bounds = array<i64: 1>, scalar_prefetch = 0 : i64, scratch_operands = 1 : i64, tpu.core_type = #tpu.core_type<tc>, window_params = [{transform_indices = @transform_0, window_bounds = array<i64: 192, 8>}, {pipeline_mode = #tpu.pipeline_mode<synchronous>, transform_indices = @transform_1, window_bounds = array<i64: 5, 8, 128>}, {pipeline_mode = #tpu.pipeline_mode<synchronous>, transform_indices = @transform_2, window_bounds = array<i64: 1, 128>}, {transform_indices = @transform_3, window_bounds = array<i64: 8, 128>}]} {
    %c0 = arith.constant 0 : index
    %c0_0 = arith.constant 0 : index
    %0 = vector.load %arg1[%c0, %c0_0] : memref<192x8xbf16, #tpu.memory_space<vmem>>, vector<184x8xbf16>
    %c0_1 = arith.constant 0 : index
    %c0_2 = arith.constant 0 : index
    %c0_3 = arith.constant 0 : index
    %1 = vector.load %arg2[%c0_1, %c0_2, %c0_3] : memref<5x8x128xbf16, #tpu.memory_space<vmem>>, vector<1x8x128xbf16>
    %2 = vector.shape_cast %1 : vector<1x8x128xbf16> to vector<8x128xbf16>
    %cst = arith.constant dense<0.000000e+00> : vector<184x128xf32>
    %3 = tpu.matmul %0, %2, %cst {dimension_numbers = #tpu.dot_dimension_numbers<[1], [0], [0], [1], [0, 0, 1, 1], [], []>} : vector<184x8xbf16>, vector<8x128xbf16>, vector<184x128xf32> -> vector<184x128xf32>
    %c1 = arith.constant 1 : index
    %c0_4 = arith.constant 0 : index
    %4 = vector.load %arg1[%c1, %c0_4] : memref<192x8xbf16, #tpu.memory_space<vmem>>, vector<184x8xbf16>
    %c1_5 = arith.constant 1 : index
    %c0_6 = arith.constant 0 : index
    %c0_7 = arith.constant 0 : index
    %5 = vector.load %arg2[%c1_5, %c0_6, %c0_7] : memref<5x8x128xbf16, #tpu.memory_space<vmem>>, vector<1x8x128xbf16>
    %6 = vector.shape_cast %5 : vector<1x8x128xbf16> to vector<8x128xbf16>
    %cst_8 = arith.constant dense<0.000000e+00> : vector<184x128xf32>
    %7 = tpu.matmul %4, %6, %cst_8 {dimension_numbers = #tpu.dot_dimension_numbers<[1], [0], [0], [1], [0, 0, 1, 1], [], []>} : vector<184x8xbf16>, vector<8x128xbf16>, vector<184x128xf32> -> vector<184x128xf32>
    %8 = arith.addf %3, %7 : vector<184x128xf32>
    %c2 = arith.constant 2 : index
    %c0_9 = arith.constant 0 : index
    %9 = vector.load %arg1[%c2, %c0_9] : memref<192x8xbf16, #tpu.memory_space<vmem>>, vector<184x8xbf16>
    %c2_10 = arith.constant 2 : index
    %c0_11 = arith.constant 0 : index
    %c0_12 = arith.constant 0 : index
    %10 = vector.load %arg2[%c2_10, %c0_11, %c0_12] : memref<5x8x128xbf16, #tpu.memory_space<vmem>>, vector<1x8x128xbf16>
    %11 = vector.shape_cast %10 : vector<1x8x128xbf16> to vector<8x128xbf16>
    %cst_13 = arith.constant dense<0.000000e+00> : vector<184x128xf32>
    %12 = tpu.matmul %9, %11, %cst_13 {dimension_numbers = #tpu.dot_dimension_numbers<[1], [0], [0], [1], [0, 0, 1, 1], [], []>} : vector<184x8xbf16>, vector<8x128xbf16>, vector<184x128xf32> -> vector<184x128xf32>
    %13 = arith.addf %8, %12 : vector<184x128xf32>
    %c3 = arith.constant 3 : index
    %c0_14 = arith.constant 0 : index
    %14 = vector.load %arg1[%c3, %c0_14] : memref<192x8xbf16, #tpu.memory_space<vmem>>, vector<184x8xbf16>
    %c3_15 = arith.constant 3 : index
    %c0_16 = arith.constant 0 : index
    %c0_17 = arith.constant 0 : index
    %15 = vector.load %arg2[%c3_15, %c0_16, %c0_17] : memref<5x8x128xbf16, #tpu.memory_space<vmem>>, vector<1x8x128xbf16>
    %16 = vector.shape_cast %15 : vector<1x8x128xbf16> to vector<8x128xbf16>
    %cst_18 = arith.constant dense<0.000000e+00> : vector<184x128xf32>
    %17 = tpu.matmul %14, %16, %cst_18 {dimension_numbers = #tpu.dot_dimension_numbers<[1], [0], [0], [1], [0, 0, 1, 1], [], []>} : vector<184x8xbf16>, vector<8x128xbf16>, vector<184x128xf32> -> vector<184x128xf32>
    %18 = arith.addf %13, %17 : vector<184x128xf32>
    %c4 = arith.constant 4 : index
    %c0_19 = arith.constant 0 : index
    %19 = vector.load %arg1[%c4, %c0_19] : memref<192x8xbf16, #tpu.memory_space<vmem>>, vector<184x8xbf16>
    %c4_20 = arith.constant 4 : index
    %c0_21 = arith.constant 0 : index
    %c0_22 = arith.constant 0 : index
    %20 = vector.load %arg2[%c4_20, %c0_21, %c0_22] : memref<5x8x128xbf16, #tpu.memory_space<vmem>>, vector<1x8x128xbf16>
    %21 = vector.shape_cast %20 : vector<1x8x128xbf16> to vector<8x128xbf16>
    %cst_23 = arith.constant dense<0.000000e+00> : vector<184x128xf32>
    %22 = tpu.matmul %19, %21, %cst_23 {dimension_numbers = #tpu.dot_dimension_numbers<[1], [0], [0], [1], [0, 0, 1, 1], [], []>} : vector<184x8xbf16>, vector<8x128xbf16>, vector<184x128xf32> -> vector<184x128xf32>
    %23 = arith.addf %18, %22 : vector<184x128xf32>
    %c0_24 = arith.constant 0 : index
    %c0_25 = arith.constant 0 : index
    %24 = vector.load %arg5[%c0_24, %c0_25] : memref<192x128xf32, #tpu.memory_space<vmem>>, vector<184x128xf32>
    tpu.vector_store %arg5[%c0_24, %c0_25], %23 {strides = array<i32>} : memref<192x128xf32, #tpu.memory_space<vmem>>, vector<184x128xf32>,
    %cst_26 = arith.constant 0.000000e+00 : f32
    %25 = vector.broadcast %cst_26 : f32 to vector<8x128xf32>
    %c184 = arith.constant 184 : index
    %c0_27 = arith.constant 0 : index
    %26 = vector.load %arg5[%c184, %c0_27] : memref<192x128xf32, #tpu.memory_space<vmem>>, vector<8x128xf32>
    tpu.vector_store %arg5[%c184, %c0_27], %25 {strides = array<i32>} : memref<192x128xf32, #tpu.memory_space<vmem>>, vector<8x128xf32>,
    %c0_28 = arith.constant 0 : index
    %c0_29 = arith.constant 0 : index
    %27 = vector.load %arg5[%c0_28, %c0_29] : memref<192x128xf32, #tpu.memory_space<vmem>>, vector<192x128xf32>
    %28 = vector.shape_cast %27 : vector<192x128xf32> to vector<8x24x128xf32>
    %29 = vector.extract_strided_slice %28 {offsets = [0, 0, 0], sizes = [8, 12, 128], strides = [1, 1, 1]} : vector<8x24x128xf32> to vector<8x12x128xf32>
    %cst_30 = arith.constant dense<0xFF800000> : vector<8x128xf32>
    %30 = vector.multi_reduction <maximumf>, %29, %cst_30 [1] : vector<8x12x128xf32> to vector<8x128xf32>
    %c0_31 = arith.constant 0 : index
    %c0_32 = arith.constant 0 : index
    %31 = vector.load %arg3[%c0_31, %c0_32] : memref<1x128xf32, #tpu.memory_space<vmem>>, vector<1x128xf32>
    %32 = vector.broadcast %31 : vector<1x128xf32> to vector<8x128xf32>
    %33 = arith.addf %30, %32 : vector<8x128xf32>
    %cst_33 = arith.constant 0.000000e+00 : f32
    %34 = vector.broadcast %cst_33 : f32 to vector<8x128xf32>
    %35 = arith.maximumf %33, %34 : vector<8x128xf32>
    %c0_34 = arith.constant 0 : index
    %c0_35 = arith.constant 0 : index
    %36 = vector.load %arg4[%c0_34, %c0_35] : memref<8x128xf32, #tpu.memory_space<vmem>>, vector<8x128xf32>
    tpu.vector_store %arg4[%c0_34, %c0_35], %35 {strides = array<i32>} : memref<8x128xf32, #tpu.memory_space<vmem>>, vector<8x128xf32>,
    return
  }
  func.func @transform_0(%arg0: i32) -> (i32, i32) {
    %c0_i32 = arith.constant 0 : i32
    %c0_i32_0 = arith.constant 0 : i32
    return %arg0, %c0_i32 : i32, i32
  }
  func.func @transform_1(%arg0: i32) -> (i32, i32, i32) {
    %c0_i32 = arith.constant 0 : i32
    %c0_i32_0 = arith.constant 0 : i32
    %c0_i32_1 = arith.constant 0 : i32
    %c0_i32_2 = arith.constant 0 : i32
    return %c0_i32, %c0_i32_0, %c0_i32_1 : i32, i32, i32
  }
  func.func @transform_2(%arg0: i32) -> (i32, i32) {
    %c0_i32 = arith.constant 0 : i32
    %c0_i32_0 = arith.constant 0 : i32
    %c0_i32_1 = arith.constant 0 : i32
    return %c0_i32, %c0_i32_0 : i32, i32
  }
  func.func @transform_3(%arg0: i32) -> (i32, i32) {
    %c0_i32 = arith.constant 0 : i32
    %c0_i32_0 = arith.constant 0 : i32
    return %arg0, %c0_i32 : i32, i32
  }
}

</mosaic_0001>

<llo_original>
// kernel: tpu_custom_call.1
$region0: #{tpu_custom_call.1}
  #allocation0 [shape = 'u32[]', space=smem, size = 0x4, offset = 0x4, fixed_abs, tag = 'smem constant byte address 0x4 - core index']
  #allocation1 [shape = 'u32[144,128]{1,0:T(1,128)}', space=vmem, size = 0x12000, scoped, tag = 'internal scratch']
  #allocation2 [shape = 'f32[192,128]{1,0:T(8,128)}', space=vmem, size = 0x18000, scoped, tag = 'scratch operand']
  %s0 = inlined_call_operand.vmem [shape: bf16[192,8], index: 0, kind: input, shape index: {}]
  %s1 = inlined_call_operand.vmem [shape: bf16[5,8,128], index: 1, kind: input, shape index: {}]
  %s2 = inlined_call_operand.vmem [shape: f32[1,128], index: 2, kind: input, shape index: {}]
  %s3 = inlined_call_operand.hbm [shape: f32[8,128], index: 3, kind: output, shape index: {}]
  %s4 = sld [smem:[#allocation0]]
  $region22: #{tpu_custom_call.1} parent=0
    _
  %s6 = ssub.s32 1, %s4
  %s7 = scalar_select 0, %s6, %s4
  $region1: #{tpu_custom_call.1} parent=0
    #allocation3 [shape = 'u8[4096]{0}', space=vmem, size = 0x1000, scoped, tag = 'output window, operand 0, single buffered']
    #allocation4 [shape = 's32[1]{0}', space=sflag, size = 0x4, scoped, tag = 'scoped memory for tpu_custom_call.1']
    %8 = vsyncpa [#allocation4], 0
    // Predicated region
    $region2: #{tpu_custom_call.1} parent=1 // pred_check
      _
    $region3: #{tpu_custom_call.1} parent=1 // pred_check_branch
      %10 = sbr.rel (0) target = $region5
    $region4: #{tpu_custom_call.1} parent=1 // pred_region
      _
    $region5: #{tpu_custom_call.1} parent=1 // pred_fallthru
      _
    // Predicated region
    $region6: #{tpu_custom_call.1} parent=1 // pred_check
      _
    $region7: #{tpu_custom_call.1} parent=1 // pred_check_branch
      %12 = sbr.rel (0) target = $region9
    $region8: #{tpu_custom_call.1} parent=1 // pred_region
      _
    $region9: #{tpu_custom_call.1} parent=1 // pred_fallthru
      _
    // Predicated region
    $region10: #{tpu_custom_call.1} parent=1 // pred_check
      _
    $region11: #{tpu_custom_call.1} parent=1 // pred_check_branch
      %14 = sbr.rel (0) target = $region13
    $region12: #{tpu_custom_call.1} parent=1 // pred_region
      _
    $region13: #{tpu_custom_call.1} parent=1 // pred_fallthru
      _
    %v16 = vld [vmem:[%s0] sm:$0xf]
    %v17 = vld [vmem:[%s0 + $0x4] sm:$0xf]
    %v18 = vld [vmem:[%s0 + $0x8] sm:$0xf]
    %v19 = vld [vmem:[%s0 + $0xc] sm:$0xf]
    %v20 = vld [vmem:[%s0 + $0x10] sm:$0xf]
    %v21 = vld [vmem:[%s0 + $0x14] sm:$0xf]
    %v22 = vld [vmem:[%s0 + $0x18] sm:$0xf]
    %v23 = vld [vmem:[%s0 + $0x1c] sm:$0xf]
    %v24 = vld [vmem:[%s0 + $0x20] sm:$0xf]
    %v25 = vld [vmem:[%s0 + $0x24] sm:$0xf]
    %v26 = vld [vmem:[%s0 + $0x28] sm:$0xf]
    %v27 = vld [vmem:[%s0 + $0x2c] sm:$0xf]
    %v28 = vld [vmem:[%s0 + $0x30] sm:$0xf]
    %v29 = vld [vmem:[%s0 + $0x34] sm:$0xf]
    %v30 = vld [vmem:[%s0 + $0x38] sm:$0xf]
    %v31 = vld [vmem:[%s0 + $0x3c] sm:$0xf]
    %v32 = vld [vmem:[%s0 + $0x40] sm:$0xf]
    %v33 = vld [vmem:[%s0 + $0x44] sm:$0xf]
    %v34 = vld [vmem:[%s0 + $0x48] sm:$0xf]
    %v35 = vld [vmem:[%s0 + $0x4c] sm:$0xf]
    %v36 = vld [vmem:[%s0 + $0x50] sm:$0xf]
    %v37 = vld [vmem:[%s0 + $0x54] sm:$0xf]
    %v38 = vld [vmem:[%s0 + $0x58] sm:$0xf]
    %v39 = vld [vmem:[%s1] sm:$0xf]
    %v40 = vld [vmem:[%s0 + $0x5c] sm:$0x1]
    %s41 = scalar_lea.vmem %s1, 4
    %v42 = vld [vmem:[%s41] sm:$0xf]
    %v67 = vunpack.c.l.b16 %v16
    %v68 = vunpack.c.l.b16 %v17
    %v69 = vunpack.c.l.b16 %v18
    %v70 = vunpack.c.l.b16 %v19
    %v71 = vunpack.c.l.b16 %v20
    %v72 = vunpack.c.l.b16 %v21
    %v73 = vunpack.c.l.b16 %v22
    %v74 = vunpack.c.l.b16 %v23
    %v75 = vunpack.c.l.b16 %v24
    %v76 = vunpack.c.l.b16 %v25
    %v77 = vunpack.c.l.b16 %v26
    %v78 = vunpack.c.l.b16 %v27
    %v79 = vunpack.c.l.b16 %v28
    %v80 = vunpack.c.l.b16 %v29
    %v81 = vunpack.c.l.b16 %v30
    %v82 = vunpack.c.l.b16 %v31
    %v83 = vunpack.c.l.b16 %v32
    %v84 = vunpack.c.l.b16 %v33
    %v85 = vunpack.c.l.b16 %v34
    %v86 = vunpack.c.l.b16 %v35
    %v87 = vunpack.c.l.b16 %v36
    %v88 = vunpack.c.l.b16 %v37
    %v89 = vunpack.c.l.b16 %v38
    %v90 = vunpack.c.l.b16 %v40
    %v91 = vpack.c.b16 %v68, %v67
    %v92 = vpack.c.b16 %v70, %v69
    %v93 = vpack.c.b16 %v72, %v71
    %v94 = vpack.c.b16 %v74, %v73
    %v95 = vpack.c.b16 %v76, %v75
    %v96 = vpack.c.b16 %v78, %v77
    %v97 = vpack.c.b16 %v80, %v79
    %v98 = vpack.c.b16 %v82, %v81
    %v99 = vpack.c.b16 %v84, %v83
    %v100 = vpack.c.b16 %v86, %v85
    %v101 = vpack.c.b16 %v88, %v87
    %v102 = vpack.c.b16 %v90, %v89
    %vm103 = vsmask.f32 7424
    %v105 = vshrl.u32 %v91, 16
    %v107 = vshll.u32 %v91, 16
    %v109 = vrot.slane %v107, 1
    %v110 = vor.u32 %v105, %v109
    %v112 = vshll.u32 %v92, 16
    %v114 = vrot.slane %v112, 1
    %v115 = vsel %vm103, %v110, %v114
    %v116 = vshrl.u32 %v92, 16
    %v118 = vor.u32 %v116, %v114
    %v120 = vshll.u32 %v93, 16
    %v122 = vrot.slane %v120, 1
    %v123 = vsel %vm103, %v118, %v122
    %v124 = vshrl.u32 %v93, 16
    %v126 = vor.u32 %v124, %v122
    %v128 = vshll.u32 %v94, 16
    %v130 = vrot.slane %v128, 1
    %v131 = vsel %vm103, %v126, %v130
    %v132 = vshrl.u32 %v94, 16
    %v134 = vor.u32 %v132, %v130
    %v136 = vshll.u32 %v95, 16
    %v138 = vrot.slane %v136, 1
    %v139 = vsel %vm103, %v134, %v138
    %v140 = vshrl.u32 %v95, 16
    %v142 = vor.u32 %v140, %v138
    %v144 = vshll.u32 %v96, 16
    %v146 = vrot.slane %v144, 1
    %v147 = vsel %vm103, %v142, %v146
    %v148 = vshrl.u32 %v96, 16
    %v150 = vor.u32 %v148, %v146
    %v152 = vshll.u32 %v97, 16
    %v154 = vrot.slane %v152, 1
    %v155 = vsel %vm103, %v150, %v154
    %v156 = vshrl.u32 %v97, 16
    %v158 = vor.u32 %v156, %v154
    %v160 = vshll.u32 %v98, 16
    %v162 = vrot.slane %v160, 1
    %v163 = vsel %vm103, %v158, %v162
    %v164 = vshrl.u32 %v98, 16
    %v166 = vor.u32 %v164, %v162
    %v168 = vshll.u32 %v99, 16
    %v170 = vrot.slane %v168, 1
    %v171 = vsel %vm103, %v166, %v170
    %v172 = vshrl.u32 %v99, 16
    %v174 = vor.u32 %v172, %v170
    %v176 = vshll.u32 %v100, 16
    %v178 = vrot.slane %v176, 1
    %v179 = vsel %vm103, %v174, %v178
    %v180 = vshrl.u32 %v100, 16
    %v182 = vor.u32 %v180, %v178
    %v184 = vshll.u32 %v101, 16
    %v186 = vrot.slane %v184, 1
    %v187 = vsel %vm103, %v182, %v186
    %v188 = vshrl.u32 %v101, 16
    %v190 = vor.u32 %v188, %v186
    %v192 = vshll.u32 %v102, 16
    %v194 = vrot.slane %v192, 1
    %v195 = vsel %vm103, %v190, %v194
    %v196 = vshrl.u32 %v102, 16
    %v198 = vor.u32 %v196, %v194
    %vm199 = vcmask 64512
    %v201 = vsel %vm199, %v115, 0
    %v204 = vsel %vm199, %v123, 0
    %v207 = vsel %vm199, %v131, 0
    %v210 = vsel %vm199, %v139, 0
    %v213 = vsel %vm199, %v147, 0
    %v216 = vsel %vm199, %v155, 0
    %v219 = vsel %vm199, %v163, 0
    %v222 = vsel %vm199, %v171, 0
    %v225 = vsel %vm199, %v179, 0
    %v228 = vsel %vm199, %v187, 0
    %v231 = vsel %vm199, %v195, 0
    %v234 = vsel %vm199, %v198, 0
    %vm236 = vcmask 1043456
    %v238 = vsel %vm236, %v42, 0
    %240 = vmatprep.subr.bf16.mxu0 0
    %241 = vmatpush1.bf16.msra.mxu0 %v238
    %242 = vmatprep.subr.bf16.mxu0 0
    %243 = vmatpush1.bf16.msra.mxu0 0
    %244 = vmatprep.subr.bf16.mxu0 0
    %245 = vmatpush1.bf16.msra.mxu0 0
    %246 = vmatprep.subr.bf16.mxu0 0
    %247 = vmatpush1.bf16.msra.mxu0 0
    %248 = vmatprep.subr.bf16.mxu0 0
    %249 = vmatpush1.bf16.msra.mxu0 0
    %250 = vmatprep.subr.bf16.mxu0 0
    %251 = vmatpush1.bf16.msra.mxu0 0
    %252 = vmatprep.subr.bf16.mxu0 0
    %253 = vmatpush1.bf16.msra.mxu0 0
    %254 = vmatprep.subr.bf16.mxu0 0
    %255 = vmatpush1.bf16.msra.mxu0 0
    %256 = vmatprep.subr.bf16.mxu0 0
    %257 = vmatpush1.bf16.msra.mxu0 0
    %258 = vmatprep.subr.bf16.mxu0 0
    %259 = vmatpush1.bf16.msra.mxu0 0
    %260 = vmatprep.subr.bf16.mxu0 0
    %261 = vmatpush1.bf16.msra.mxu0 0
    %262 = vmatprep.subr.bf16.mxu0 0
    %263 = vmatpush1.bf16.msra.mxu0 0
    %264 = vmatprep.subr.bf16.mxu0 0
    %265 = vmatpush1.bf16.msra.mxu0 0
    %266 = vmatprep.subr.bf16.mxu0 0
    %267 = vmatpush1.bf16.msra.mxu0 0
    %268 = vmatprep.subr.bf16.mxu0 0
    %269 = vmatpush1.bf16.msra.mxu0 0
    %270 = vmatprep.subr.bf16.mxu0 0
    %271 = vmatpush1.bf16.msra.mxu0 0
    %272 = vmatprep.mubr.bf16.mxu0 0
    %273 = vmatmul.mubr.bf16.gmra.mrb[0].mxu0 %v201
    %v274 = vpop.f32.mrb[0].mxu0
    %v275 = vadd.f32 0.0, %v274
    %v276 = vpop.f32.mrb[0].mxu0
    %v277 = vpop.f32.mrb[0].mxu0
    %v278 = vadd.f32 0.0, %v277
    %v279 = vpop.f32.mrb[0].mxu0
    %280 = vmatprep.mubr.bf16.mxu0 0
    %281 = vmatmul.mubr.bf16.gmra.mrb[0].mxu0 %v204
    %v282 = vpop.f32.mrb[0].mxu0
    %v283 = vadd.f32 0.0, %v282
    %v284 = vpop.f32.mrb[0].mxu0
    %v285 = vpop.f32.mrb[0].mxu0
    %v286 = vadd.f32 0.0, %v285
    %v287 = vpop.f32.mrb[0].mxu0
    %288 = vmatprep.mubr.bf16.mxu0 0
    %289 = vmatmul.mubr.bf16.gmra.mrb[0].mxu0 %v207
    %v290 = vpop.f32.mrb[0].mxu0
    %v291 = vadd.f32 0.0, %v290
    %v292 = vpop.f32.mrb[0].mxu0
    %v293 = vpop.f32.mrb[0].mxu0
    %v294 = vadd.f32 0.0, %v293
    %v295 = vpop.f32.mrb[0].mxu0
    %296 = vmatprep.mubr.bf16.mxu0 0
    %297 = vmatmul.mubr.bf16.gmra.mrb[0].mxu0 %v210
    %v298 = vpop.f32.mrb[0].mxu0
    %v299 = vadd.f32 0.0, %v298
    %v300 = vpop.f32.mrb[0].mxu0
    %v301 = vpop.f32.mrb[0].mxu0
    %v302 = vadd.f32 0.0, %v301
    %v303 = vpop.f32.mrb[0].mxu0
    %304 = vmatprep.mubr.bf16.mxu0 0
    %305 = vmatmul.mubr.bf16.gmra.mrb[0].mxu0 %v213
    %v306 = vpop.f32.mrb[0].mxu0
    %v307 = vadd.f32 0.0, %v306
    %v308 = vpop.f32.mrb[0].mxu0
    %v309 = vpop.f32.mrb[0].mxu0
    %v310 = vadd.f32 0.0, %v309
    %v311 = vpop.f32.mrb[0].mxu0
    %312 = vmatprep.mubr.bf16.mxu0 0
    %313 = vmatmul.mubr.bf16.gmra.mrb[0].mxu0 %v216
    %v314 = vpop.f32.mrb[0].mxu0
    %v315 = vadd.f32 0.0, %v314
    %v316 = vpop.f32.mrb[0].mxu0
    %v317 = vpop.f32.mrb[0].mxu0
    %v318 = vadd.f32 0.0, %v317
    %v319 = vpop.f32.mrb[0].mxu0
    %320 = vmatprep.mubr.bf16.mxu0 0
    %321 = vmatmul.mubr.bf16.gmra.mrb[0].mxu0 %v219
    %v322 = vpop.f32.mrb[0].mxu0
    %v323 = vadd.f32 0.0, %v322
    %v324 = vpop.f32.mrb[0].mxu0
    %v325 = vpop.f32.mrb[0].mxu0
    %v326 = vadd.f32 0.0, %v325
    %v327 = vpop.f32.mrb[0].mxu0
    %328 = vmatprep.mubr.bf16.mxu0 0
    %329 = vmatmul.mubr.bf16.gmra.mrb[0].mxu0 %v222
    %v330 = vpop.f32.mrb[0].mxu0
    %v331 = vadd.f32 0.0, %v330
    %v332 = vpop.f32.mrb[0].mxu0
    %v333 = vpop.f32.mrb[0].mxu0
    %v334 = vadd.f32 0.0, %v333
    %v335 = vpop.f32.mrb[0].mxu0
    %336 = vmatprep.mubr.bf16.mxu0 0
    %337 = vmatmul.mubr.bf16.gmra.mrb[0].mxu0 %v225
    %v338 = vpop.f32.mrb[0].mxu0
    %v339 = vadd.f32 0.0, %v338
    %v340 = vpop.f32.mrb[0].mxu0
    %v341 = vpop.f32.mrb[0].mxu0
    %v342 = vadd.f32 0.0, %v341
    %v343 = vpop.f32.mrb[0].mxu0
    %344 = vmatprep.mubr.bf16.mxu0 0
    %345 = vmatmul.mubr.bf16.gmra.mrb[0].mxu0 %v228
    %v346 = vpop.f32.mrb[0].mxu0
    %v347 = vadd.f32 0.0, %v346
    %v348 = vpop.f32.mrb[0].mxu0
    %v349 = vpop.f32.mrb[0].mxu0
    %v350 = vadd.f32 0.0, %v349
    %v351 = vpop.f32.mrb[0].mxu0
    %352 = vmatprep.mubr.bf16.mxu0 0
    %353 = vmatmul.mubr.bf16.gmra.mrb[0].mxu0 %v231
    %v354 = vpop.f32.mrb[0].mxu0
    %v355 = vadd.f32 0.0, %v354
    %v356 = vpop.f32.mrb[0].mxu0
    %v357 = vpop.f32.mrb[0].mxu0
    %v358 = vadd.f32 0.0, %v357
    %v359 = vpop.f32.mrb[0].mxu0
    %360 = vmatprep.mubr.bf16.mxu0 0
    %361 = vmatmul.mubr.bf16.gmra.mrb[0].mxu0 %v234
    %v362 = vpop.f32.mrb[0].mxu0
    %v363 = vadd.f32 0.0, %v362
    %v364 = vpop.f32.mrb[0].mxu0
    %v365 = vpop.f32.mrb[0].mxu0
    %v366 = vpop.f32.mrb[0].mxu0
    %367 = vdwg.mxu0
    %v368 = vpack.c.b16 %v89, %v89
    %v369 = vsel %vm199, %v91, 0
    %v371 = vsel %vm199, %v92, 0
    %v373 = vsel %vm199, %v93, 0
    %v375 = vsel %vm199, %v94, 0
    %v377 = vsel %vm199, %v95, 0
    %v379 = vsel %vm199, %v96, 0
    %v381 = vsel %vm199, %v97, 0
    %v383 = vsel %vm199, %v98, 0
    %v385 = vsel %vm199, %v99, 0
    %v387 = vsel %vm199, %v100, 0
    %v389 = vsel %vm199, %v101, 0
    %v392 = vsel %vm199, %v368, 0
    %v395 = vsel %vm236, %v39, 0
    %397 = vmatprep.subr.bf16.mxu0 0
    %398 = vmatpush1.bf16.msra.mxu0 %v395
    %399 = vmatprep.subr.bf16.mxu0 0
    %400 = vmatpush1.bf16.msra.mxu0 0
    %401 = vmatprep.subr.bf16.mxu0 0
    %402 = vmatpush1.bf16.msra.mxu0 0
    %403 = vmatprep.subr.bf16.mxu0 0
    %404 = vmatpush1.bf16.msra.mxu0 0
    %405 = vmatprep.subr.bf16.mxu0 0
    %406 = vmatpush1.bf16.msra.mxu0 0
    %407 = vmatprep.subr.bf16.mxu0 0
    %408 = vmatpush1.bf16.msra.mxu0 0
    %409 = vmatprep.subr.bf16.mxu0 0
    %410 = vmatpush1.bf16.msra.mxu0 0
    %411 = vmatprep.subr.bf16.mxu0 0
    %412 = vmatpush1.bf16.msra.mxu0 0
    %413 = vmatprep.subr.bf16.mxu0 0
    %414 = vmatpush1.bf16.msra.mxu0 0
    %415 = vmatprep.subr.bf16.mxu0 0
    %416 = vmatpush1.bf16.msra.mxu0 0
    %417 = vmatprep.subr.bf16.mxu0 0
    %418 = vmatpush1.bf16.msra.mxu0 0
    %419 = vmatprep.subr.bf16.mxu0 0
    %420 = vmatpush1.bf16.msra.mxu0 0
    %421 = vmatprep.subr.bf16.mxu0 0
    %422 = vmatpush1.bf16.msra.mxu0 0
    %423 = vmatprep.subr.bf16.mxu0 0
    %424 = vmatpush1.bf16.msra.mxu0 0
    %425 = vmatprep.subr.bf16.mxu0 0
    %426 = vmatpush1.bf16.msra.mxu0 0
    %427 = vmatprep.subr.bf16.mxu0 0
    %428 = vmatpush1.bf16.msra.mxu0 0
    %429 = vmatprep.mubr.bf16.mxu0 0
    %430 = vmatmul.mubr.bf16.gmra.mrb[0].mxu0 %v369
    %v431 = vpop.f32.mrb[0].mxu0
    %v432 = vadd.f32 %v275, %v431
    %v433 = vpop.f32.mrb[0].mxu0
    %v434 = vpop.f32.mrb[0].mxu0
    %v435 = vadd.f32 %v278, %v434
    %v436 = vpop.f32.mrb[0].mxu0
    %437 = vmatprep.mubr.bf16.mxu0 0
    %438 = vmatmul.mubr.bf16.gmra.mrb[0].mxu0 %v371
    %v439 = vpop.f32.mrb[0].mxu0
    %v440 = vadd.f32 %v283, %v439
    %v441 = vpop.f32.mrb[0].mxu0
    %v442 = vpop.f32.mrb[0].mxu0
    %v443 = vadd.f32 %v286, %v442
    %v444 = vpop.f32.mrb[0].mxu0
    %445 = vmatprep.mubr.bf16.mxu0 0
    %446 = vmatmul.mubr.bf16.gmra.mrb[0].mxu0 %v373
    %v447 = vpop.f32.mrb[0].mxu0
    %v448 = vadd.f32 %v291, %v447
    %v449 = vpop.f32.mrb[0].mxu0
    %v450 = vpop.f32.mrb[0].mxu0
    %v451 = vadd.f32 %v294, %v450
    %v452 = vpop.f32.mrb[0].mxu0
    %453 = vmatprep.mubr.bf16.mxu0 0
    %454 = vmatmul.mubr.bf16.gmra.mrb[0].mxu0 %v375
    %v455 = vpop.f32.mrb[0].mxu0
    %v456 = vadd.f32 %v299, %v455
    %v457 = vpop.f32.mrb[0].mxu0
    %v458 = vpop.f32.mrb[0].mxu0
    %v459 = vadd.f32 %v302, %v458
    %v460 = vpop.f32.mrb[0].mxu0
    %461 = vmatprep.mubr.bf16.mxu0 0
    %462 = vmatmul.mubr.bf16.gmra.mrb[0].mxu0 %v377
    %v463 = vpop.f32.mrb[0].mxu0
    %v464 = vadd.f32 %v307, %v463
    %v465 = vpop.f32.mrb[0].mxu0
    %v466 = vpop.f32.mrb[0].mxu0
    %v467 = vadd.f32 %v310, %v466
    %v468 = vpop.f32.mrb[0].mxu0
    %469 = vmatprep.mubr.bf16.mxu0 0
    %470 = vmatmul.mubr.bf16.gmra.mrb[0].mxu0 %v379
    %v471 = vpop.f32.mrb[0].mxu0
    %v472 = vadd.f32 %v315, %v471
    %v473 = vpop.f32.mrb[0].mxu0
    %v474 = vpop.f32.mrb[0].mxu0
    %v475 = vadd.f32 %v318, %v474
    %v476 = vpop.f32.mrb[0].mxu0
    %477 = vmatprep.mubr.bf16.mxu0 0
    %478 = vmatmul.mubr.bf16.gmra.mrb[0].mxu0 %v381
    %v479 = vpop.f32.mrb[0].mxu0
    %v480 = vadd.f32 %v323, %v479
    %v481 = vpop.f32.mrb[0].mxu0
    %v482 = vpop.f32.mrb[0].mxu0
    %v483 = vadd.f32 %v326, %v482
    %v484 = vpop.f32.mrb[0].mxu0
    %485 = vmatprep.mubr.bf16.mxu0 0
    %486 = vmatmul.mubr.bf16.gmra.mrb[0].mxu0 %v383
    %v487 = vpop.f32.mrb[0].mxu0
    %v488 = vadd.f32 %v331, %v487
    %v489 = vpop.f32.mrb[0].mxu0
    %v490 = vpop.f32.mrb[0].mxu0
    %v491 = vadd.f32 %v334, %v490
    %v492 = vpop.f32.mrb[0].mxu0
    %493 = vmatprep.mubr.bf16.mxu0 0
    %494 = vmatmul.mubr.bf16.gmra.mrb[0].mxu0 %v385
    %v495 = vpop.f32.mrb[0].mxu0
    %v496 = vadd.f32 %v339, %v495
    %v497 = vpop.f32.mrb[0].mxu0
    %v498 = vpop.f32.mrb[0].mxu0
    %v499 = vadd.f32 %v342, %v498
    %v500 = vpop.f32.mrb[0].mxu0
    %501 = vmatprep.mubr.bf16.mxu0 0
    %502 = vmatmul.mubr.bf16.gmra.mrb[0].mxu0 %v387
    %v503 = vpop.f32.mrb[0].mxu0
    %v504 = vadd.f32 %v347, %v503
    %v505 = vpop.f32.mrb[0].mxu0
    %v506 = vpop.f32.mrb[0].mxu0
    %v507 = vadd.f32 %v350, %v506
    %v508 = vpop.f32.mrb[0].mxu0
    %509 = vmatprep.mubr.bf16.mxu0 0
    %510 = vmatmul.mubr.bf16.gmra.mrb[0].mxu0 %v389
    %v511 = vpop.f32.mrb[0].mxu0
    %v512 = vadd.f32 %v355, %v511
    %v513 = vpop.f32.mrb[0].mxu0
    %v514 = vpop.f32.mrb[0].mxu0
    %v515 = vadd.f32 %v358, %v514
    %v516 = vpop.f32.mrb[0].mxu0
    %517 = vmatprep.mubr.bf16.mxu0 0
    %518 = vmatmul.mubr.bf16.gmra.mrb[0].mxu0 %v392
    %v519 = vpop.f32.mrb[0].mxu0
    %v520 = vadd.f32 %v363, %v519
    %v521 = vpop.f32.mrb[0].mxu0
    %v522 = vpop.f32.mrb[0].mxu0
    %v523 = vpop.f32.mrb[0].mxu0
    %524 = vdwg.mxu0
    %v525 = vld [vmem:[%s0] sm:$0xe]
    %s526 = scalar_lea.vmem %s1, 8
    %v527 = vld [vmem:[%s526] sm:$0xf]
    %v529 = vunpack.c.l.b16 %v525
    %v530 = vpack.c.b16 %v68, %v529
    %vm531 = vcmask 1046528
    %v532 = vrot.slane %v530, 1
    %v533 = vrot.slane %v92, 1
    %v534 = vsel %vm531, %v532, %v533
    %v535 = vrot.slane %v93, 1
    %v536 = vsel %vm531, %v533, %v535
    %v537 = vrot.slane %v94, 1
    %v538 = vsel %vm531, %v535, %v537
    %v539 = vrot.slane %v95, 1
    %v540 = vsel %vm531, %v537, %v539
    %v541 = vrot.slane %v96, 1
    %v542 = vsel %vm531, %v539, %v541
    %v543 = vrot.slane %v97, 1
    %v544 = vsel %vm531, %v541, %v543
    %v545 = vrot.slane %v98, 1
    %v546 = vsel %vm531, %v543, %v545
    %v547 = vrot.slane %v99, 1
    %v548 = vsel %vm531, %v545, %v547
    %v549 = vrot.slane %v100, 1
    %v550 = vsel %vm531, %v547, %v549
    %v551 = vrot.slane %v101, 1
    %v552 = vsel %vm531, %v549, %v551
    %v553 = vrot.slane %v102, 1
    %v554 = vsel %vm531, %v551, %v553
    %v556 = vsel %vm199, %v534, 0
    %v559 = vsel %vm199, %v536, 0
    %v562 = vsel %vm199, %v538, 0
    %v565 = vsel %vm199, %v540, 0
    %v568 = vsel %vm199, %v542, 0
    %v571 = vsel %vm199, %v544, 0
    %v574 = vsel %vm199, %v546, 0
    %v577 = vsel %vm199, %v548, 0
    %v580 = vsel %vm199, %v550, 0
    %v583 = vsel %vm199, %v552, 0
    %v586 = vsel %vm199, %v554, 0
    %v589 = vsel %vm199, %v553, 0
    %v592 = vsel %vm236, %v527, 0
    %594 = vmatprep.subr.bf16.mxu0 0
    %595 = vmatpush1.bf16.msra.mxu0 %v592
    %596 = vmatprep.subr.bf16.mxu0 0
    %597 = vmatpush1.bf16.msra.mxu0 0
    %598 = vmatprep.subr.bf16.mxu0 0
    %599 = vmatpush1.bf16.msra.mxu0 0
    %600 = vmatprep.subr.bf16.mxu0 0
    %601 = vmatpush1.bf16.msra.mxu0 0
    %602 = vmatprep.subr.bf16.mxu0 0
    %603 = vmatpush1.bf16.msra.mxu0 0
    %604 = vmatprep.subr.bf16.mxu0 0
    %605 = vmatpush1.bf16.msra.mxu0 0
    %606 = vmatprep.subr.bf16.mxu0 0
    %607 = vmatpush1.bf16.msra.mxu0 0
    %608 = vmatprep.subr.bf16.mxu0 0
    %609 = vmatpush1.bf16.msra.mxu0 0
    %610 = vmatprep.subr.bf16.mxu0 0
    %611 = vmatpush1.bf16.msra.mxu0 0
    %612 = vmatprep.subr.bf16.mxu0 0
    %613 = vmatpush1.bf16.msra.mxu0 0
    %614 = vmatprep.subr.bf16.mxu0 0
    %615 = vmatpush1.bf16.msra.mxu0 0
    %616 = vmatprep.subr.bf16.mxu0 0
    %617 = vmatpush1.bf16.msra.mxu0 0
    %618 = vmatprep.subr.bf16.mxu0 0
    %619 = vmatpush1.bf16.msra.mxu0 0
    %620 = vmatprep.subr.bf16.mxu0 0
    %621 = vmatpush1.bf16.msra.mxu0 0
    %622 = vmatprep.subr.bf16.mxu0 0
    %623 = vmatpush1.bf16.msra.mxu0 0
    %624 = vmatprep.subr.bf16.mxu0 0
    %625 = vmatpush1.bf16.msra.mxu0 0
    %626 = vmatprep.mubr.bf16.mxu0 0
    %627 = vmatmul.mubr.bf16.gmra.mrb[0].mxu0 %v556
    %v628 = vpop.f32.mrb[0].mxu0
    %v629 = vadd.f32 0.0, %v628
    %v630 = vpop.f32.mrb[0].mxu0
    %v631 = vpop.f32.mrb[0].mxu0
    %v632 = vadd.f32 0.0, %v631
    %v633 = vpop.f32.mrb[0].mxu0
    %634 = vmatprep.mubr.bf16.mxu0 0
    %635 = vmatmul.mubr.bf16.gmra.mrb[0].mxu0 %v559
    %v636 = vpop.f32.mrb[0].mxu0
    %v637 = vadd.f32 0.0, %v636
    %v638 = vpop.f32.mrb[0].mxu0
    %v639 = vpop.f32.mrb[0].mxu0
    %v640 = vadd.f32 0.0, %v639
    %v641 = vpop.f32.mrb[0].mxu0
    %642 = vmatprep.mubr.bf16.mxu0 0
    %643 = vmatmul.mubr.bf16.gmra.mrb[0].mxu0 %v562
    %v644 = vpop.f32.mrb[0].mxu0
    %v645 = vadd.f32 0.0, %v644
    %v646 = vpop.f32.mrb[0].mxu0
    %v647 = vpop.f32.mrb[0].mxu0
    %v648 = vadd.f32 0.0, %v647
    %v649 = vpop.f32.mrb[0].mxu0
    %650 = vmatprep.mubr.bf16.mxu0 0
    %651 = vmatmul.mubr.bf16.gmra.mrb[0].mxu0 %v565
    %v652 = vpop.f32.mrb[0].mxu0
    %v653 = vadd.f32 0.0, %v652
    %v654 = vpop.f32.mrb[0].mxu0
    %v655 = vpop.f32.mrb[0].mxu0
    %v656 = vadd.f32 0.0, %v655
    %v657 = vpop.f32.mrb[0].mxu0
    %658 = vmatprep.mubr.bf16.mxu0 0
    %659 = vmatmul.mubr.bf16.gmra.mrb[0].mxu0 %v568
    %v660 = vpop.f32.mrb[0].mxu0
    %v661 = vadd.f32 0.0, %v660
    %v662 = vpop.f32.mrb[0].mxu0
    %v663 = vpop.f32.mrb[0].mxu0
    %v664 = vadd.f32 0.0, %v663
    %v665 = vpop.f32.mrb[0].mxu0
    %666 = vmatprep.mubr.bf16.mxu0 0
    %667 = vmatmul.mubr.bf16.gmra.mrb[0].mxu0 %v571
    %v668 = vpop.f32.mrb[0].mxu0
    %v669 = vadd.f32 0.0, %v668
    %v670 = vpop.f32.mrb[0].mxu0
    %v671 = vpop.f32.mrb[0].mxu0
    %v672 = vadd.f32 0.0, %v671
    %v673 = vpop.f32.mrb[0].mxu0
    %674 = vmatprep.mubr.bf16.mxu0 0
    %675 = vmatmul.mubr.bf16.gmra.mrb[0].mxu0 %v574
    %v676 = vpop.f32.mrb[0].mxu0
    %v677 = vadd.f32 0.0, %v676
    %v678 = vpop.f32.mrb[0].mxu0
    %v679 = vpop.f32.mrb[0].mxu0
    %v680 = vadd.f32 0.0, %v679
    %v681 = vpop.f32.mrb[0].mxu0
    %682 = vmatprep.mubr.bf16.mxu0 0
    %683 = vmatmul.mubr.bf16.gmra.mrb[0].mxu0 %v577
    %v684 = vpop.f32.mrb[0].mxu0
    %v685 = vadd.f32 0.0, %v684
    %v686 = vpop.f32.mrb[0].mxu0
    %v687 = vpop.f32.mrb[0].mxu0
    %v688 = vadd.f32 0.0, %v687
    %v689 = vpop.f32.mrb[0].mxu0
    %690 = vmatprep.mubr.bf16.mxu0 0
    %691 = vmatmul.mubr.bf16.gmra.mrb[0].mxu0 %v580
    %v692 = vpop.f32.mrb[0].mxu0
    %v693 = vadd.f32 0.0, %v692
    %v694 = vpop.f32.mrb[0].mxu0
    %v695 = vpop.f32.mrb[0].mxu0
    %v696 = vadd.f32 0.0, %v695
    %v697 = vpop.f32.mrb[0].mxu0
    %698 = vmatprep.mubr.bf16.mxu0 0
    %699 = vmatmul.mubr.bf16.gmra.mrb[0].mxu0 %v583
    %v700 = vpop.f32.mrb[0].mxu0
    %v701 = vadd.f32 0.0, %v700
    %v702 = vpop.f32.mrb[0].mxu0
    %v703 = vpop.f32.mrb[0].mxu0
    %v704 = vadd.f32 0.0, %v703
    %v705 = vpop.f32.mrb[0].mxu0
    %706 = vmatprep.mubr.bf16.mxu0 0
    %707 = vmatmul.mubr.bf16.gmra.mrb[0].mxu0 %v586
    %v708 = vpop.f32.mrb[0].mxu0
    %v709 = vadd.f32 0.0, %v708
    %v710 = vpop.f32.mrb[0].mxu0
    %v711 = vpop.f32.mrb[0].mxu0
    %v712 = vadd.f32 0.0, %v711
    %v713 = vpop.f32.mrb[0].mxu0
    %714 = vmatprep.mubr.bf16.mxu0 0
    %715 = vmatmul.mubr.bf16.gmra.mrb[0].mxu0 %v589
    %v716 = vpop.f32.mrb[0].mxu0
    %v717 = vadd.f32 0.0, %v716
    %v718 = vpop.f32.mrb[0].mxu0
    %v719 = vpop.f32.mrb[0].mxu0
    %v720 = vpop.f32.mrb[0].mxu0
    %721 = vdwg.mxu0
    %v722 = vadd.f32 %v432, %v629
    %v723 = vadd.f32 %v435, %v632
    %v724 = vadd.f32 %v440, %v637
    %v725 = vadd.f32 %v443, %v640
    %v726 = vadd.f32 %v448, %v645
    %v727 = vadd.f32 %v451, %v648
    %v728 = vadd.f32 %v456, %v653
    %v729 = vadd.f32 %v459, %v656
    %v730 = vadd.f32 %v464, %v661
    %v731 = vadd.f32 %v467, %v664
    %v732 = vadd.f32 %v472, %v669
    %v733 = vadd.f32 %v475, %v672
    %v734 = vadd.f32 %v480, %v677
    %v735 = vadd.f32 %v483, %v680
    %v736 = vadd.f32 %v488, %v685
    %v737 = vadd.f32 %v491, %v688
    %v738 = vadd.f32 %v496, %v693
    %v739 = vadd.f32 %v499, %v696
    %v740 = vadd.f32 %v504, %v701
    %v741 = vadd.f32 %v507, %v704
    %v742 = vadd.f32 %v512, %v709
    %v743 = vadd.f32 %v515, %v712
    %v744 = vadd.f32 %v520, %v717
    %v745 = vld [vmem:[%s0 + $0x5c] sm:$0x3]
    %s746 = scalar_lea.vmem %s1, 12
    %v747 = vld [vmem:[%s746] sm:$0xf]
    %v749 = vunpack.c.l.b16 %v745
    %v750 = vpack.c.b16 %v749, %v89
    %vm751 = vsmask.f32 6400
    %v753 = vshrl.u32 %v530, 16
    %v755 = vrot.slane %v753, 1
    %v756 = vshll.u32 %v530, 16
    %v758 = vrot.slane %v756, 2
    %v759 = vor.u32 %v755, %v758
    %v760 = vrot.slane %v116, 1
    %v761 = vrot.slane %v112, 2
    %v762 = vor.u32 %v760, %v761
    %v763 = vsel %vm751, %v759, %v762
    %v764 = vrot.slane %v124, 1
    %v765 = vrot.slane %v120, 2
    %v766 = vor.u32 %v764, %v765
    %v767 = vsel %vm751, %v762, %v766
    %v768 = vrot.slane %v132, 1
    %v769 = vrot.slane %v128, 2
    %v770 = vor.u32 %v768, %v769
    %v771 = vsel %vm751, %v766, %v770
    %v772 = vrot.slane %v140, 1
    %v773 = vrot.slane %v136, 2
    %v774 = vor.u32 %v772, %v773
    %v775 = vsel %vm751, %v770, %v774
    %v776 = vrot.slane %v148, 1
    %v777 = vrot.slane %v144, 2
    %v778 = vor.u32 %v776, %v777
    %v779 = vsel %vm751, %v774, %v778
    %v780 = vrot.slane %v156, 1
    %v781 = vrot.slane %v152, 2
    %v782 = vor.u32 %v780, %v781
    %v783 = vsel %vm751, %v778, %v782
    %v784 = vrot.slane %v164, 1
    %v785 = vrot.slane %v160, 2
    %v786 = vor.u32 %v784, %v785
    %v787 = vsel %vm751, %v782, %v786
    %v788 = vrot.slane %v172, 1
    %v789 = vrot.slane %v168, 2
    %v790 = vor.u32 %v788, %v789
    %v791 = vsel %vm751, %v786, %v790
    %v792 = vrot.slane %v180, 1
    %v793 = vrot.slane %v176, 2
    %v794 = vor.u32 %v792, %v793
    %v795 = vsel %vm751, %v790, %v794
    %v796 = vrot.slane %v188, 1
    %v797 = vrot.slane %v184, 2
    %v798 = vor.u32 %v796, %v797
    %v799 = vsel %vm751, %v794, %v798
    %v801 = vshrl.u32 %v750, 16
    %v803 = vrot.slane %v801, 1
    %v804 = vshll.u32 %v750, 16
    %v806 = vrot.slane %v804, 2
    %v807 = vor.u32 %v803, %v806
    %v808 = vsel %vm751, %v798, %v807
    %v810 = vsel %vm199, %v763, 0
    %v813 = vsel %vm199, %v767, 0
    %v816 = vsel %vm199, %v771, 0
    %v819 = vsel %vm199, %v775, 0
    %v822 = vsel %vm199, %v779, 0
    %v825 = vsel %vm199, %v783, 0
    %v828 = vsel %vm199, %v787, 0
    %v831 = vsel %vm199, %v791, 0
    %v834 = vsel %vm199, %v795, 0
    %v837 = vsel %vm199, %v799, 0
    %v840 = vsel %vm199, %v808, 0
    %v843 = vsel %vm199, %v807, 0
    %v846 = vsel %vm236, %v747, 0
    %848 = vmatprep.subr.bf16.mxu0 0
    %849 = vmatpush1.bf16.msra.mxu0 %v846
    %850 = vmatprep.subr.bf16.mxu0 0
    %851 = vmatpush1.bf16.msra.mxu0 0
    %852 = vmatprep.subr.bf16.mxu0 0
    %853 = vmatpush1.bf16.msra.mxu0 0
    %854 = vmatprep.subr.bf16.mxu0 0
    %855 = vmatpush1.bf16.msra.mxu0 0
    %856 = vmatprep.subr.bf16.mxu0 0
    %857 = vmatpush1.bf16.msra.mxu0 0
    %858 = vmatprep.subr.bf16.mxu0 0
    %859 = vmatpush1.bf16.msra.mxu0 0
    %860 = vmatprep.subr.bf16.mxu0 0
    %861 = vmatpush1.bf16.msra.mxu0 0
    %862 = vmatprep.subr.bf16.mxu0 0
    %863 = vmatpush1.bf16.msra.mxu0 0
    %864 = vmatprep.subr.bf16.mxu0 0
    %865 = vmatpush1.bf16.msra.mxu0 0
    %866 = vmatprep.subr.bf16.mxu0 0
    %867 = vmatpush1.bf16.msra.mxu0 0
    %868 = vmatprep.subr.bf16.mxu0 0
    %869 = vmatpush1.bf16.msra.mxu0 0
    %870 = vmatprep.subr.bf16.mxu0 0
    %871 = vmatpush1.bf16.msra.mxu0 0
    %872 = vmatprep.subr.bf16.mxu0 0
    %873 = vmatpush1.bf16.msra.mxu0 0
    %874 = vmatprep.subr.bf16.mxu0 0
    %875 = vmatpush1.bf16.msra.mxu0 0
    %876 = vmatprep.subr.bf16.mxu0 0
    %877 = vmatpush1.bf16.msra.mxu0 0
    %878 = vmatprep.subr.bf16.mxu0 0
    %879 = vmatpush1.bf16.msra.mxu0 0
    %880 = vmatprep.mubr.bf16.mxu0 0
    %881 = vmatmul.mubr.bf16.gmra.mrb[0].mxu0 %v810
    %v882 = vpop.f32.mrb[0].mxu0
    %v883 = vadd.f32 0.0, %v882
    %v884 = vpop.f32.mrb[0].mxu0
    %v885 = vpop.f32.mrb[0].mxu0
    %v886 = vadd.f32 0.0, %v885
    %v887 = vpop.f32.mrb[0].mxu0
    %888 = vmatprep.mubr.bf16.mxu0 0
    %889 = vmatmul.mubr.bf16.gmra.mrb[0].mxu0 %v813
    %v890 = vpop.f32.mrb[0].mxu0
    %v891 = vadd.f32 0.0, %v890
    %v892 = vpop.f32.mrb[0].mxu0
    %v893 = vpop.f32.mrb[0].mxu0
    %v894 = vadd.f32 0.0, %v893
    %v895 = vpop.f32.mrb[0].mxu0
    %896 = vmatprep.mubr.bf16.mxu0 0
    %897 = vmatmul.mubr.bf16.gmra.mrb[0].mxu0 %v816
    %v898 = vpop.f32.mrb[0].mxu0
    %v899 = vadd.f32 0.0, %v898
    %v900 = vpop.f32.mrb[0].mxu0
    %v901 = vpop.f32.mrb[0].mxu0
    %v902 = vadd.f32 0.0, %v901
    %v903 = vpop.f32.mrb[0].mxu0
    %904 = vmatprep.mubr.bf16.mxu0 0
    %905 = vmatmul.mubr.bf16.gmra.mrb[0].mxu0 %v819
    %v906 = vpop.f32.mrb[0].mxu0
    %v907 = vadd.f32 0.0, %v906
    %v908 = vpop.f32.mrb[0].mxu0
    %v909 = vpop.f32.mrb[0].mxu0
    %v910 = vadd.f32 0.0, %v909
    %v911 = vpop.f32.mrb[0].mxu0
    %912 = vmatprep.mubr.bf16.mxu0 0
    %913 = vmatmul.mubr.bf16.gmra.mrb[0].mxu0 %v822
    %v914 = vpop.f32.mrb[0].mxu0
    %v915 = vadd.f32 0.0, %v914
    %v916 = vpop.f32.mrb[0].mxu0
    %v917 = vpop.f32.mrb[0].mxu0
    %v918 = vadd.f32 0.0, %v917
    %v919 = vpop.f32.mrb[0].mxu0
    %920 = vmatprep.mubr.bf16.mxu0 0
    %921 = vmatmul.mubr.bf16.gmra.mrb[0].mxu0 %v825
    %v922 = vpop.f32.mrb[0].mxu0
    %v923 = vadd.f32 0.0, %v922
    %v924 = vpop.f32.mrb[0].mxu0
    %v925 = vpop.f32.mrb[0].mxu0
    %v926 = vadd.f32 0.0, %v925
    %v927 = vpop.f32.mrb[0].mxu0
    %928 = vmatprep.mubr.bf16.mxu0 0
    %929 = vmatmul.mubr.bf16.gmra.mrb[0].mxu0 %v828
    %v930 = vpop.f32.mrb[0].mxu0
    %v931 = vadd.f32 0.0, %v930
    %v932 = vpop.f32.mrb[0].mxu0
    %v933 = vpop.f32.mrb[0].mxu0
    %v934 = vadd.f32 0.0, %v933
    %v935 = vpop.f32.mrb[0].mxu0
    %936 = vmatprep.mubr.bf16.mxu0 0
    %937 = vmatmul.mubr.bf16.gmra.mrb[0].mxu0 %v831
    %v938 = vpop.f32.mrb[0].mxu0
    %v939 = vadd.f32 0.0, %v938
    %v940 = vpop.f32.mrb[0].mxu0
    %v941 = vpop.f32.mrb[0].mxu0
    %v942 = vadd.f32 0.0, %v941
    %v943 = vpop.f32.mrb[0].mxu0
    %944 = vmatprep.mubr.bf16.mxu0 0
    %945 = vmatmul.mubr.bf16.gmra.mrb[0].mxu0 %v834
    %v946 = vpop.f32.mrb[0].mxu0
    %v947 = vadd.f32 0.0, %v946
    %v948 = vpop.f32.mrb[0].mxu0
    %v949 = vpop.f32.mrb[0].mxu0
    %v950 = vadd.f32 0.0, %v949
    %v951 = vpop.f32.mrb[0].mxu0
    %952 = vmatprep.mubr.bf16.mxu0 0
    %953 = vmatmul.mubr.bf16.gmra.mrb[0].mxu0 %v837
    %v954 = vpop.f32.mrb[0].mxu0
    %v955 = vadd.f32 0.0, %v954
    %v956 = vpop.f32.mrb[0].mxu0
    %v957 = vpop.f32.mrb[0].mxu0
    %v958 = vadd.f32 0.0, %v957
    %v959 = vpop.f32.mrb[0].mxu0
    %960 = vmatprep.mubr.bf16.mxu0 0
    %961 = vmatmul.mubr.bf16.gmra.mrb[0].mxu0 %v840
    %v962 = vpop.f32.mrb[0].mxu0
    %v963 = vadd.f32 0.0, %v962
    %v964 = vpop.f32.mrb[0].mxu0
    %v965 = vpop.f32.mrb[0].mxu0
    %v966 = vadd.f32 0.0, %v965
    %v967 = vpop.f32.mrb[0].mxu0
    %968 = vmatprep.mubr.bf16.mxu0 0
    %969 = vmatmul.mubr.bf16.gmra.mrb[0].mxu0 %v843
    %v970 = vpop.f32.mrb[0].mxu0
    %v971 = vadd.f32 0.0, %v970
    %v972 = vpop.f32.mrb[0].mxu0
    %v973 = vpop.f32.mrb[0].mxu0
    %v974 = vpop.f32.mrb[0].mxu0
    %975 = vdwg.mxu0
    %v976 = vadd.f32 %v722, %v883
    %v977 = vadd.f32 %v723, %v886
    %v978 = vadd.f32 %v724, %v891
    %v979 = vadd.f32 %v725, %v894
    %v980 = vadd.f32 %v726, %v899
    %v981 = vadd.f32 %v727, %v902
    %v982 = vadd.f32 %v728, %v907
    %v983 = vadd.f32 %v729, %v910
    %v984 = vadd.f32 %v730, %v915
    %v985 = vadd.f32 %v731, %v918
    %v986 = vadd.f32 %v732, %v923
    %v987 = vadd.f32 %v733, %v926
    %v988 = vadd.f32 %v734, %v931
    %v989 = vadd.f32 %v735, %v934
    %v990 = vadd.f32 %v736, %v939
    %v991 = vadd.f32 %v737, %v942
    %v992 = vadd.f32 %v738, %v947
    %v993 = vadd.f32 %v739, %v950
    %v994 = vadd.f32 %v740, %v955
    %v995 = vadd.f32 %v741, %v958
    %v996 = vadd.f32 %v742, %v963
    %v997 = vadd.f32 %v743, %v966
    %v998 = vadd.f32 %v744, %v971
    %v999 = vld [vmem:[%s0] sm:$0xc]
    %s1000 = scalar_lea.vmem %s1, 16
    %v1001 = vld [vmem:[%s1000] sm:$0xf]
    %v1003 = vunpack.c.l.b16 %v999
    %v1004 = vpack.c.b16 %v68, %v1003
    %vm1005 = vcmask 1045504
    %v1006 = vrot.slane %v1004, 2
    %v1007 = vrot.slane %v92, 2
    %v1008 = vsel %vm1005, %v1006, %v1007
    %v1009 = vrot.slane %v93, 2
    %v1010 = vsel %vm1005, %v1007, %v1009
    %v1011 = vrot.slane %v94, 2
    %v1012 = vsel %vm1005, %v1009, %v1011
    %v1013 = vrot.slane %v95, 2
    %v1014 = vsel %vm1005, %v1011, %v1013
    %v1015 = vrot.slane %v96, 2
    %v1016 = vsel %vm1005, %v1013, %v1015
    %v1017 = vrot.slane %v97, 2
    %v1018 = vsel %vm1005, %v1015, %v1017
    %v1019 = vrot.slane %v98, 2
    %v1020 = vsel %vm1005, %v1017, %v1019
    %v1021 = vrot.slane %v99, 2
    %v1022 = vsel %vm1005, %v1019, %v1021
    %v1023 = vrot.slane %v100, 2
    %v1024 = vsel %vm1005, %v1021, %v1023
    %v1025 = vrot.slane %v101, 2
    %v1026 = vsel %vm1005, %v1023, %v1025
    %v1027 = vrot.slane %v750, 2
    %v1028 = vsel %vm1005, %v1025, %v1027
    %v1030 = vsel %vm199, %v1008, 0
    %v1033 = vsel %vm199, %v1010, 0
    %v1036 = vsel %vm199, %v1012, 0
    %v1039 = vsel %vm199, %v1014, 0
    %v1042 = vsel %vm199, %v1016, 0
    %v1045 = vsel %vm199, %v1018, 0
    %v1048 = vsel %vm199, %v1020, 0
    %v1051 = vsel %vm199, %v1022, 0
    %v1054 = vsel %vm199, %v1024, 0
    %v1057 = vsel %vm199, %v1026, 0
    %v1060 = vsel %vm199, %v1028, 0
    %v1063 = vsel %vm199, %v1027, 0
    %v1066 = vsel %vm236, %v1001, 0
    %1068 = vmatprep.subr.bf16.mxu0 0
    %1069 = vmatpush1.bf16.msra.mxu0 %v1066
    %1070 = vmatprep.subr.bf16.mxu0 0
    %1071 = vmatpush1.bf16.msra.mxu0 0
    %1072 = vmatprep.subr.bf16.mxu0 0
    %1073 = vmatpush1.bf16.msra.mxu0 0
    %1074 = vmatprep.subr.bf16.mxu0 0
    %1075 = vmatpush1.bf16.msra.mxu0 0
    %1076 = vmatprep.subr.bf16.mxu0 0
    %1077 = vmatpush1.bf16.msra.mxu0 0
    %1078 = vmatprep.subr.bf16.mxu0 0
    %1079 = vmatpush1.bf16.msra.mxu0 0
    %1080 = vmatprep.subr.bf16.mxu0 0
    %1081 = vmatpush1.bf16.msra.mxu0 0
    %1082 = vmatprep.subr.bf16.mxu0 0
    %1083 = vmatpush1.bf16.msra.mxu0 0
    %1084 = vmatprep.subr.bf16.mxu0 0
    %1085 = vmatpush1.bf16.msra.mxu0 0
    %1086 = vmatprep.subr.bf16.mxu0 0
    %1087 = vmatpush1.bf16.msra.mxu0 0
    %1088 = vmatprep.subr.bf16.mxu0 0
    %1089 = vmatpush1.bf16.msra.mxu0 0
    %1090 = vmatprep.subr.bf16.mxu0 0
    %1091 = vmatpush1.bf16.msra.mxu0 0
    %1092 = vmatprep.subr.bf16.mxu0 0
    %1093 = vmatpush1.bf16.msra.mxu0 0
    %1094 = vmatprep.subr.bf16.mxu0 0
    %1095 = vmatpush1.bf16.msra.mxu0 0
    %1096 = vmatprep.subr.bf16.mxu0 0
    %1097 = vmatpush1.bf16.msra.mxu0 0
    %1098 = vmatprep.subr.bf16.mxu0 0
    %1099 = vmatpush1.bf16.msra.mxu0 0
    %1100 = vmatprep.mubr.bf16.mxu0 0
    %1101 = vmatmul.mubr.bf16.gmra.mrb[0].mxu0 %v1030
    %v1102 = vpop.f32.mrb[0].mxu0
    %v1103 = vadd.f32 0.0, %v1102
    %v1104 = vpop.f32.mrb[0].mxu0
    %v1105 = vpop.f32.mrb[0].mxu0
    %v1106 = vadd.f32 0.0, %v1105
    %v1107 = vpop.f32.mrb[0].mxu0
    %1108 = vmatprep.mubr.bf16.mxu0 0
    %1109 = vmatmul.mubr.bf16.gmra.mrb[0].mxu0 %v1033
    %v1110 = vpop.f32.mrb[0].mxu0
    %v1111 = vadd.f32 0.0, %v1110
    %v1112 = vpop.f32.mrb[0].mxu0
    %v1113 = vpop.f32.mrb[0].mxu0
    %v1114 = vadd.f32 0.0, %v1113
    %v1115 = vpop.f32.mrb[0].mxu0
    %1116 = vmatprep.mubr.bf16.mxu0 0
    %1117 = vmatmul.mubr.bf16.gmra.mrb[0].mxu0 %v1036
    %v1118 = vpop.f32.mrb[0].mxu0
    %v1119 = vadd.f32 0.0, %v1118
    %v1120 = vpop.f32.mrb[0].mxu0
    %v1121 = vpop.f32.mrb[0].mxu0
    %v1122 = vadd.f32 0.0, %v1121
    %v1123 = vpop.f32.mrb[0].mxu0
    %1124 = vmatprep.mubr.bf16.mxu0 0
    %1125 = vmatmul.mubr.bf16.gmra.mrb[0].mxu0 %v1039
    %v1126 = vpop.f32.mrb[0].mxu0
    %v1127 = vadd.f32 0.0, %v1126
    %v1128 = vpop.f32.mrb[0].mxu0
    %v1129 = vpop.f32.mrb[0].mxu0
    %v1130 = vadd.f32 0.0, %v1129
    %v1131 = vpop.f32.mrb[0].mxu0
    %1132 = vmatprep.mubr.bf16.mxu0 0
    %1133 = vmatmul.mubr.bf16.gmra.mrb[0].mxu0 %v1042
    %v1134 = vpop.f32.mrb[0].mxu0
    %v1135 = vadd.f32 0.0, %v1134
    %v1136 = vpop.f32.mrb[0].mxu0
    %v1137 = vpop.f32.mrb[0].mxu0
    %v1138 = vadd.f32 0.0, %v1137
    %v1139 = vpop.f32.mrb[0].mxu0
    %1140 = vmatprep.mubr.bf16.mxu0 0
    %1141 = vmatmul.mubr.bf16.gmra.mrb[0].mxu0 %v1045
    %v1142 = vpop.f32.mrb[0].mxu0
    %v1143 = vadd.f32 0.0, %v1142
    %v1144 = vpop.f32.mrb[0].mxu0
    %v1145 = vpop.f32.mrb[0].mxu0
    %v1146 = vadd.f32 0.0, %v1145
    %v1147 = vpop.f32.mrb[0].mxu0
    %1148 = vmatprep.mubr.bf16.mxu0 0
    %1149 = vmatmul.mubr.bf16.gmra.mrb[0].mxu0 %v1048
    %v1150 = vpop.f32.mrb[0].mxu0
    %v1151 = vadd.f32 0.0, %v1150
    %v1152 = vpop.f32.mrb[0].mxu0
    %v1153 = vpop.f32.mrb[0].mxu0
    %v1154 = vadd.f32 0.0, %v1153
    %v1155 = vpop.f32.mrb[0].mxu0
    %1156 = vmatprep.mubr.bf16.mxu0 0
    %1157 = vmatmul.mubr.bf16.gmra.mrb[0].mxu0 %v1051
    %v1158 = vpop.f32.mrb[0].mxu0
    %v1159 = vadd.f32 0.0, %v1158
    %v1160 = vpop.f32.mrb[0].mxu0
    %v1161 = vpop.f32.mrb[0].mxu0
    %v1162 = vadd.f32 0.0, %v1161
    %v1163 = vpop.f32.mrb[0].mxu0
    %1164 = vmatprep.mubr.bf16.mxu0 0
    %1165 = vmatmul.mubr.bf16.gmra.mrb[0].mxu0 %v1054
    %v1166 = vpop.f32.mrb[0].mxu0
    %v1167 = vadd.f32 0.0, %v1166
    %v1168 = vpop.f32.mrb[0].mxu0
    %v1169 = vpop.f32.mrb[0].mxu0
    %v1170 = vadd.f32 0.0, %v1169
    %v1171 = vpop.f32.mrb[0].mxu0
    %1172 = vmatprep.mubr.bf16.mxu0 0
    %1173 = vmatmul.mubr.bf16.gmra.mrb[0].mxu0 %v1057
    %v1174 = vpop.f32.mrb[0].mxu0
    %v1175 = vadd.f32 0.0, %v1174
    %v1176 = vpop.f32.mrb[0].mxu0
    %v1177 = vpop.f32.mrb[0].mxu0
    %v1178 = vadd.f32 0.0, %v1177
    %v1179 = vpop.f32.mrb[0].mxu0
    %1180 = vmatprep.mubr.bf16.mxu0 0
    %1181 = vmatmul.mubr.bf16.gmra.mrb[0].mxu0 %v1060
    %v1182 = vpop.f32.mrb[0].mxu0
    %v1183 = vadd.f32 0.0, %v1182
    %v1184 = vpop.f32.mrb[0].mxu0
    %v1185 = vpop.f32.mrb[0].mxu0
    %v1186 = vadd.f32 0.0, %v1185
    %v1187 = vpop.f32.mrb[0].mxu0
    %1188 = vmatprep.mubr.bf16.mxu0 0
    %1189 = vmatmul.mubr.bf16.gmra.mrb[0].mxu0 %v1063
    %v1190 = vpop.f32.mrb[0].mxu0
    %v1191 = vadd.f32 0.0, %v1190
    %v1192 = vpop.f32.mrb[0].mxu0
    %v1193 = vpop.f32.mrb[0].mxu0
    %v1194 = vpop.f32.mrb[0].mxu0
    %1195 = vdwg.mxu0
    %v1196 = vadd.f32 %v976, %v1103
    %v1197 = vadd.f32 %v977, %v1106
    %v1198 = vadd.f32 %v978, %v1111
    %v1199 = vadd.f32 %v979, %v1114
    %v1200 = vadd.f32 %v980, %v1119
    %v1201 = vadd.f32 %v981, %v1122
    %v1202 = vadd.f32 %v982, %v1127
    %v1203 = vadd.f32 %v983, %v1130
    %v1204 = vadd.f32 %v984, %v1135
    %v1205 = vadd.f32 %v985, %v1138
    %v1206 = vadd.f32 %v986, %v1143
    %v1207 = vadd.f32 %v987, %v1146
    %v1208 = vadd.f32 %v988, %v1151
    %v1209 = vadd.f32 %v989, %v1154
    %v1210 = vadd.f32 %v990, %v1159
    %v1211 = vadd.f32 %v991, %v1162
    %v1212 = vadd.f32 %v992, %v1167
    %v1213 = vadd.f32 %v993, %v1170
    %v1214 = vadd.f32 %v994, %v1175
    %v1215 = vadd.f32 %v995, %v1178
    %v1216 = vadd.f32 %v996, %v1183
    %v1217 = vadd.f32 %v997, %v1186
    %v1218 = vadd.f32 %v998, %v1191
    %1219 = vst [vmem:[#allocation2] sm:$0xff] %v1196
    %1220 = vst [vmem:[#allocation2 + $0x8] sm:$0xff] %v1197
    %1221 = vst [vmem:[#allocation2 + $0x10] sm:$0xff] %v1198
    %1222 = vst [vmem:[#allocation2 + $0x18] sm:$0xff] %v1199
    %1223 = vst [vmem:[#allocation2 + $0x20] sm:$0xff] %v1200
    %1224 = vst [vmem:[#allocation2 + $0x28] sm:$0xff] %v1201
    %1225 = vst [vmem:[#allocation2 + $0x30] sm:$0xff] %v1202
    %1226 = vst [vmem:[#allocation2 + $0x38] sm:$0xff] %v1203
    %1227 = vst [vmem:[#allocation2 + $0x40] sm:$0xff] %v1204
    %1228 = vst [vmem:[#allocation2 + $0x48] sm:$0xff] %v1205
    %1229 = vst [vmem:[#allocation2 + $0x50] sm:$0xff] %v1206
    %1230 = vst [vmem:[#allocation2 + $0x58] sm:$0xff] %v1207
    %1231 = vst [vmem:[#allocation2 + $0x60] sm:$0xff] %v1208
    %1232 = vst [vmem:[#allocation2 + $0x68] sm:$0xff] %v1209
    %1233 = vst [vmem:[#allocation2 + $0x70] sm:$0xff] %v1210
    %1234 = vst [vmem:[#allocation2 + $0x78] sm:$0xff] %v1211
    %1235 = vst [vmem:[#allocation2 + $0x80] sm:$0xff] %v1212
    %1236 = vst [vmem:[#allocation2 + $0x88] sm:$0xff] %v1213
    %1237 = vst [vmem:[#allocation2 + $0x90] sm:$0xff] %v1214
    %1238 = vst [vmem:[#allocation2 + $0x98] sm:$0xff] %v1215
    %1239 = vst [vmem:[#allocation2 + $0xa0] sm:$0xff] %v1216
    %1240 = vst [vmem:[#allocation2 + $0xa8] sm:$0xff] %v1217
    %1241 = vst [vmem:[#allocation2 + $0xb0] sm:$0xff] %v1218
    %1242 = vst [vmem:[#allocation2 + $0xb8] sm:$0xff] 0.0
    %v1243 = vld [vmem:[#allocation2] sm:$0xff]
    %v1244 = vld [vmem:[#allocation2 + $0x8] sm:$0xff]
    %v1245 = vld [vmem:[#allocation2 + $0x18] sm:$0xff]
    %v1246 = vld [vmem:[#allocation2 + $0x20] sm:$0xff]
    %v1247 = vld [vmem:[#allocation2 + $0x30] sm:$0xff]
    %v1248 = vld [vmem:[#allocation2 + $0x38] sm:$0xff]
    %v1249 = vld [vmem:[#allocation2 + $0x48] sm:$0xff]
    %v1250 = vld [vmem:[#allocation2 + $0x50] sm:$0xff]
    %v1251 = vld [vmem:[#allocation2 + $0x60] sm:$0xff]
    %v1252 = vld [vmem:[#allocation2 + $0x68] sm:$0xff]
    %v1253 = vld [vmem:[#allocation2 + $0x78] sm:$0xff]
    %v1254 = vld [vmem:[#allocation2 + $0x80] sm:$0xff]
    %v1255 = vld [vmem:[#allocation2 + $0x90] sm:$0xff]
    %v1256 = vld [vmem:[#allocation2 + $0x98] sm:$0xff]
    %v1257 = vld [vmem:[#allocation2 + $0xa8] sm:$0xff]
    %v1258 = vld [vmem:[#allocation2 + $0xb0] sm:$0xff]
    %v1259 = vsel %vm236, %v1244, -inf
    %v1260 = vmax.f32 %v1243, %v1259
    %v1261 = vrot.slane %v1260, 4
    %v1262 = vmax.f32 %v1260, %v1261
    %v1263 = vrot.slane %v1262, 2
    %v1264 = vmax.f32 %v1262, %v1263
    %v1265 = vrot.slane %v1264, 1
    %v1266 = vmax.f32 %v1264, %v1265
    %v1267 = vsel %vm236, %v1246, -inf
    %v1268 = vmax.f32 %v1245, %v1267
    %v1269 = vrot.slane %v1268, 4
    %v1270 = vmax.f32 %v1268, %v1269
    %v1271 = vrot.slane %v1270, 2
    %v1272 = vmax.f32 %v1270, %v1271
    %v1273 = vrot.slane %v1272, 1
    %v1274 = vmax.f32 %v1272, %v1273
    %v1275 = vsel %vm236, %v1248, -inf
    %v1276 = vmax.f32 %v1247, %v1275
    %v1277 = vrot.slane %v1276, 4
    %v1278 = vmax.f32 %v1276, %v1277
    %v1279 = vrot.slane %v1278, 2
    %v1280 = vmax.f32 %v1278, %v1279
    %v1281 = vrot.slane %v1280, 1
    %v1282 = vmax.f32 %v1280, %v1281
    %v1283 = vsel %vm236, %v1250, -inf
    %v1284 = vmax.f32 %v1249, %v1283
    %v1285 = vrot.slane %v1284, 4
    %v1286 = vmax.f32 %v1284, %v1285
    %v1287 = vrot.slane %v1286, 2
    %v1288 = vmax.f32 %v1286, %v1287
    %v1289 = vrot.slane %v1288, 1
    %v1290 = vmax.f32 %v1288, %v1289
    %v1291 = vsel %vm236, %v1252, -inf
    %v1292 = vmax.f32 %v1251, %v1291
    %v1293 = vrot.slane %v1292, 4
    %v1294 = vmax.f32 %v1292, %v1293
    %v1295 = vrot.slane %v1294, 2
    %v1296 = vmax.f32 %v1294, %v1295
    %v1297 = vrot.slane %v1296, 1
    %v1298 = vmax.f32 %v1296, %v1297
    %v1299 = vsel %vm236, %v1254, -inf
    %v1300 = vmax.f32 %v1253, %v1299
    %v1301 = vrot.slane %v1300, 4
    %v1302 = vmax.f32 %v1300, %v1301
    %v1303 = vrot.slane %v1302, 2
    %v1304 = vmax.f32 %v1302, %v1303
    %v1305 = vrot.slane %v1304, 1
    %v1306 = vmax.f32 %v1304, %v1305
    %v1307 = vsel %vm236, %v1256, -inf
    %v1308 = vmax.f32 %v1255, %v1307
    %v1309 = vrot.slane %v1308, 4
    %v1310 = vmax.f32 %v1308, %v1309
    %v1311 = vrot.slane %v1310, 2
    %v1312 = vmax.f32 %v1310, %v1311
    %v1313 = vrot.slane %v1312, 1
    %v1314 = vmax.f32 %v1312, %v1313
    %v1315 = vsel %vm236, %v1258, -inf
    %v1316 = vmax.f32 %v1257, %v1315
    %v1317 = vrot.slane %v1316, 4
    %v1318 = vmax.f32 %v1316, %v1317
    %v1319 = vrot.slane %v1318, 2
    %v1320 = vmax.f32 %v1318, %v1319
    %v1321 = vrot.slane %v1320, 1
    %v1322 = vmax.f32 %v1320, %v1321
    %v1323 = vld [vmem:[%s2] sm:$0x1]
    %v1325 = vlaneseq
    %v1326 = vshrl.u32 %v1325, 7
    %v1327 = vsub.s32 0, %v1326
    %v1328 = vrot.slane %v1323, %v1327
    %v1330 = vadd.f32 %v1266, %v1328
    %v1331 = vadd.f32 %v1274, %v1328
    %v1332 = vadd.f32 %v1282, %v1328
    %v1333 = vadd.f32 %v1290, %v1328
    %v1334 = vadd.f32 %v1298, %v1328
    %v1335 = vadd.f32 %v1306, %v1328
    %v1336 = vadd.f32 %v1314, %v1328
    %v1337 = vadd.f32 %v1322, %v1328
    %v1338 = vmax.f32 %v1330, 0.0
    %v1339 = vmax.f32 %v1331, 0.0
    %v1340 = vmax.f32 %v1332, 0.0
    %v1341 = vmax.f32 %v1333, 0.0
    %v1342 = vmax.f32 %v1334, 0.0
    %v1343 = vmax.f32 %v1335, 0.0
    %v1344 = vmax.f32 %v1336, 0.0
    %v1345 = vmax.f32 %v1337, 0.0
    %v1354 = vrot.slane %v1339, 7
    %vm1355 = vcmask 1041409
    %v1356 = vsel %vm1355, %v1354, %v1338
    %v1357 = vrot.slane %v1340, 6
    %vm1358 = vcmask 1042434
    %v1359 = vsel %vm1358, %v1357, %v1356
    %v1360 = vrot.slane %v1341, 5
    %vm1361 = vcmask 1043459
    %v1362 = vsel %vm1361, %v1360, %v1359
    %v1363 = vrot.slane %v1342, 4
    %vm1364 = vcmask 1044484
    %v1365 = vsel %vm1364, %v1363, %v1362
    %v1366 = vrot.slane %v1343, 3
    %vm1367 = vcmask 1045509
    %v1368 = vsel %vm1367, %v1366, %v1365
    %v1369 = vrot.slane %v1344, 2
    %vm1370 = vcmask 1046534
    %v1371 = vsel %vm1370, %v1369, %v1368
    %v1372 = vrot.slane %v1345, 1
    %vm1373 = vcmask 1047559
    %v1374 = vsel %vm1373, %v1372, %v1371
    %1376 = vst [vmem:[#allocation3] sm:$0xff] %v1374
    // Predicated region
    $region14: #{tpu_custom_call.1} parent=1 // pred_check
      _
    $region15: #{tpu_custom_call.1} parent=1 // pred_check_branch
      %1378 = sbr.rel (0) target = $region17
    $region16: #{tpu_custom_call.1} parent=1 // pred_region
      %s1380 = ssub.s32 128, 128
      %1381 = vsyncadd [#allocation4], %s1380
      %s1383 = sshll.u32 [#allocation3], 4
      %s1384 = int_to_ptr.vmem [resolvable:$true] %s1383
      %1386 = dma.vmem_to_hbm [thread:$0]  %s1384, 128, %s3, [#allocation4]
    $region17: #{tpu_custom_call.1} parent=1 // pred_fallthru
      _
    // Predicated region
    $region18: #{tpu_custom_call.1} parent=1 // pred_check
      _
    $region19: #{tpu_custom_call.1} parent=1 // pred_check_branch
      %1388 = sbr.rel (0) target = $region21
    $region20: #{tpu_custom_call.1} parent=1 // pred_region
      %1389 = dma.done [#allocation4], 128
    $region21: #{tpu_custom_call.1} parent=1 // pred_fallthru
      _
    %1390 = vsyncpa [#allocation4], 1

</llo_original>
